<compile_context>
chip_gen: v6e
topology: v6e:2x2x1
jax: 0.10.0
libtpu: 0.0.40
codegen_flags: <defaults>
</compile_context>

<pallas_src>
import jax
import jax.numpy as jnp
from jax.experimental import pallas as pl
from jax.experimental.pallas import tpu as pltpu

IN_FEATURES = 128
OUT_FEATURES = 64

MAX_TILE_B = 8192            # rows per grid step; multiple of 8
MIN_GRID_STEPS = 4           # keep >=4 steps so v7x megacore + pipeline overlap
SMALL_BATCH_THRESHOLD = 1024 # below this, plain JAX beats pallas launch cost
VMEM_LIMIT_BYTES = 48 << 20  # clears v5e's 16 MiB default, < v7x's 64 MiB phys


def _round_up(x, m):
    return ((x + m - 1) // m) * m


def _merger_kernel(x_ref, wt_ref, b_ref, o_ref):
    # x_ref: [tile_b, 128]  wt_ref: [128, 64]  b_ref: [1, 64]  o_ref: [tile_b, 64]
    acc = jnp.dot(x_ref[...], wt_ref[...], preferred_element_type=jnp.float32)
    o_ref[...] = (acc + b_ref[...]).astype(o_ref.dtype)


def merger_forward(x, weight, bias, *, max_tile_b=MAX_TILE_B, use_pallas=None):
    """x: [B, ...] with prod(...) == 128 (flattened like torch's x.view(B, -1)).
    weight: [64, 128] (PyTorch nn.Linear layout).  bias: [64].
    Returns [B, 64]."""
    B = x.shape[0]
    x2d = x.reshape(B, -1)
    assert x2d.shape[1] == IN_FEATURES, f"expected {IN_FEATURES} flat features"

    if use_pallas is None:
        use_pallas = B >= SMALL_BATCH_THRESHOLD
    if not use_pallas:
        # Small-batch fast path: XLA's native fusion wins below ~1K rows.
        return x2d @ weight.T + bias

    # One-time 32 KiB transpose so the kernel contracts [tile_b,128]x[128,64]
    # with no per-step transpose of the weight operand.
    w_t = weight.T                       # [128, 64]
    b2d = bias.reshape(1, OUT_FEATURES)  # [1, 64]

    # Batch tile: as large as possible (amortize per-step overhead) but keep
    # at least MIN_GRID_STEPS grid steps so v7x's two TCs both get work.
    tile_b = max(8, min(max_tile_b, _round_up(pl.cdiv(B, MIN_GRID_STEPS), 8)))
    grid = (pl.cdiv(B, tile_b),)         # ragged last tile handled by Pallas

    bytes_accessed = (
        B * (IN_FEATURES + OUT_FEATURES) * 4
        + IN_FEATURES * OUT_FEATURES * 4
        + OUT_FEATURES * 4
    )
    cost = pl.CostEstimate(
        flops=2 * B * IN_FEATURES * OUT_FEATURES,
        transcendentals=0,
        bytes_accessed=bytes_accessed,
    )

    out = pl.pallas_call(
        _merger_kernel,
        out_shape=jax.ShapeDtypeStruct((B, OUT_FEATURES), x.dtype),
        grid=grid,
        in_specs=[
            # Streamed batch tile (double-buffered by the Pallas pipeline).
            pl.BlockSpec((tile_b, IN_FEATURES), lambda i: (i, 0)),
            # Weight & bias stay resident in VMEM across all grid steps.
            pl.BlockSpec((IN_FEATURES, OUT_FEATURES), lambda i: (0, 0)),
            pl.BlockSpec((1, OUT_FEATURES), lambda i: (0, 0)),
        ],
        out_specs=pl.BlockSpec((tile_b, OUT_FEATURES), lambda i: (i, 0)),
        compiler_params=pltpu.CompilerParams(
            dimension_semantics=("parallel",),
            vmem_limit_bytes=VMEM_LIMIT_BYTES,
        ),
        cost_estimate=cost,
    )(x2d, w_t, b2d)
    return out


if __name__ == "__main__":
    key = jax.random.PRNGKey(0)
    k_x, k_w, k_b, k_x2 = jax.random.split(key, 4)

    # Small NCHW input whose flattened feature dim is 128: [2, 8, 4, 4]
    x = jax.random.normal(k_x, (2, 8, 4, 4), dtype=jnp.float32)

    # Deterministic parameter init mirroring nn.Linear(128, 64) shapes:
    # weight [64, 128], bias [64] — uniform in [-1/sqrt(128), 1/sqrt(128)].
    bound = 1.0 / (IN_FEATURES ** 0.5)
    weight = jax.random.uniform(
        k_w, (OUT_FEATURES, IN_FEATURES), minval=-bound, maxval=bound,
        dtype=jnp.float32)
    bias = jax.random.uniform(
        k_b, (OUT_FEATURES,), minval=-bound, maxval=bound, dtype=jnp.float32)

    # Force the Pallas path so the kernel itself is exercised at small B.
    y = merger_forward(x, weight, bias, use_pallas=True)
    jax.block_until_ready(y)
    y_ref = x.reshape(x.shape[0], -1) @ weight.T + bias
    assert y.shape == (2, OUT_FEATURES)
    assert jnp.allclose(y, y_ref, atol=1e-5, rtol=1e-5)

    # Also exercise a ragged multi-tile grid (B=20 -> tile_b=8, 3 grid steps,
    # last tile partial) through the kernel.
    x2 = jax.random.normal(k_x2, (20, 8, 4, 4), dtype=jnp.float32)
    y2 = merger_forward(x2, weight, bias, use_pallas=True)
    jax.block_until_ready(y2)
    y2_ref = x2.reshape(x2.shape[0], -1) @ weight.T + bias
    assert y2.shape == (20, OUT_FEATURES)
    assert jnp.allclose(y2, y2_ref, atol=1e-5, rtol=1e-5)

    # Auto path (small B -> plain JAX fast path) must match too.
    y_auto = merger_forward(x, weight, bias)
    jax.block_until_ready(y_auto)
    assert jnp.allclose(y_auto, y_ref, atol=1e-5, rtol=1e-5)

    print("KERNEL_OK")
</pallas_src>

<mosaic_0001>
module attributes {stable_mosaic.version = 11 : i64} {
  func.func @_merger_kernel(%arg0: i32, %arg1: memref<8x128xf32, #tpu.memory_space<vmem>>, %arg2: memref<128x64xf32, #tpu.memory_space<vmem>>, %arg3: memref<1x64xf32, #tpu.memory_space<vmem>>, %arg4: memref<8x64xf32, #tpu.memory_space<vmem>>) attributes {dimension_semantics = [#tpu.dimension_semantics<parallel>], iteration_bounds = array<i64: 1>, scalar_prefetch = 0 : i64, scratch_operands = 0 : i64, tpu.core_type = #tpu.core_type<tc>, window_params = [{transform_indices = @transform_0, window_bounds = array<i64: 8, 128>}, {pipeline_mode = #tpu.pipeline_mode<synchronous>, transform_indices = @transform_1, window_bounds = array<i64: 128, 64>}, {pipeline_mode = #tpu.pipeline_mode<synchronous>, transform_indices = @transform_2, window_bounds = array<i64: 1, 64>}, {transform_indices = @transform_3, window_bounds = array<i64: 8, 64>}]} {
    %c0 = arith.constant 0 : index
    %c0_0 = arith.constant 0 : index
    %0 = vector.load %arg1[%c0, %c0_0] : memref<8x128xf32, #tpu.memory_space<vmem>>, vector<8x128xf32>
    %c0_1 = arith.constant 0 : index
    %c0_2 = arith.constant 0 : index
    %1 = vector.load %arg2[%c0_1, %c0_2] : memref<128x64xf32, #tpu.memory_space<vmem>>, vector<128x64xf32>
    %cst = arith.constant dense<0.000000e+00> : vector<8x64xf32>
    %2 = tpu.matmul %0, %1, %cst {dimension_numbers = #tpu.dot_dimension_numbers<[1], [0], [0], [1], [0, 0, 1, 1], [], []>} : vector<8x128xf32>, vector<128x64xf32>, vector<8x64xf32> -> vector<8x64xf32>
    %c0_3 = arith.constant 0 : index
    %c0_4 = arith.constant 0 : index
    %3 = vector.load %arg3[%c0_3, %c0_4] : memref<1x64xf32, #tpu.memory_space<vmem>>, vector<1x64xf32>
    %4 = vector.broadcast %3 : vector<1x64xf32> to vector<8x64xf32>
    %5 = arith.addf %2, %4 : vector<8x64xf32>
    %c0_5 = arith.constant 0 : index
    %c0_6 = arith.constant 0 : index
    %6 = vector.load %arg4[%c0_5, %c0_6] : memref<8x64xf32, #tpu.memory_space<vmem>>, vector<8x64xf32>
    tpu.vector_store %arg4[%c0_5, %c0_6], %5 {strides = array<i32>} : memref<8x64xf32, #tpu.memory_space<vmem>>, vector<8x64xf32>,
    return
  }
  func.func @transform_0(%arg0: i32) -> (i32, i32) {
    %c0_i32 = arith.constant 0 : i32
    %c0_i32_0 = arith.constant 0 : i32
    return %arg0, %c0_i32 : i32, i32
  }
  func.func @transform_1(%arg0: i32) -> (i32, i32) {
    %c0_i32 = arith.constant 0 : i32
    %c0_i32_0 = arith.constant 0 : i32
    %c0_i32_1 = arith.constant 0 : i32
    return %c0_i32, %c0_i32_0 : i32, i32
  }
  func.func @transform_2(%arg0: i32) -> (i32, i32) {
    %c0_i32 = arith.constant 0 : i32
    %c0_i32_0 = arith.constant 0 : i32
    %c0_i32_1 = arith.constant 0 : i32
    return %c0_i32, %c0_i32_0 : i32, i32
  }
  func.func @transform_3(%arg0: i32) -> (i32, i32) {
    %c0_i32 = arith.constant 0 : i32
    %c0_i32_0 = arith.constant 0 : i32
    return %arg0, %c0_i32 : i32, i32
  }
}

</mosaic_0001>

<llo_original>
// kernel: tpu_custom_call.1
$region0: #{tpu_custom_call.1}
  #allocation0 [shape = 'u32[]', space=smem, size = 0x4, offset = 0x4, fixed_abs, tag = 'smem constant byte address 0x4 - core index']
  #allocation1 [shape = 'u32[144,128]{1,0:T(1,128)}', space=vmem, size = 0x12000, scoped, tag = 'internal scratch']
  %s0 = inlined_call_operand.vmem [shape: f32[2,128], index: 0, kind: input, shape index: {}]
  %s1 = inlined_call_operand.vmem [shape: f32[128,64], index: 1, kind: input, shape index: {}]
  %s2 = inlined_call_operand.vmem [shape: f32[1,64], index: 2, kind: input, shape index: {}]
  %s3 = inlined_call_operand.hbm [shape: f32[2,64], index: 3, kind: output, shape index: {}]
  %s4 = sld [smem:[#allocation0]]
  $region22: #{tpu_custom_call.1} parent=0
    _
  %s6 = ssub.s32 1, %s4
  %s7 = scalar_select 0, %s6, %s4
  $region1: #{tpu_custom_call.1} parent=0
    #allocation2 [shape = 'u8[4096]{0}', space=vmem, size = 0x1000, scoped, tag = 'output window, operand 0, single buffered']
    #allocation3 [shape = 's32[1]{0}', space=sflag, size = 0x4, scoped, tag = 'scoped memory for tpu_custom_call.1']
    %8 = vsyncpa [#allocation3], 0
    // Predicated region
    $region2: #{tpu_custom_call.1} parent=1 // pred_check
      _
    $region3: #{tpu_custom_call.1} parent=1 // pred_check_branch
      %10 = sbr.rel (0) target = $region5
    $region4: #{tpu_custom_call.1} parent=1 // pred_region
      _
    $region5: #{tpu_custom_call.1} parent=1 // pred_fallthru
      _
    // Predicated region
    $region6: #{tpu_custom_call.1} parent=1 // pred_check
      _
    $region7: #{tpu_custom_call.1} parent=1 // pred_check_branch
      %12 = sbr.rel (0) target = $region9
    $region8: #{tpu_custom_call.1} parent=1 // pred_region
      _
    $region9: #{tpu_custom_call.1} parent=1 // pred_fallthru
      _
    // Predicated region
    $region10: #{tpu_custom_call.1} parent=1 // pred_check
      _
    $region11: #{tpu_custom_call.1} parent=1 // pred_check_branch
      %14 = sbr.rel (0) target = $region13
    $region12: #{tpu_custom_call.1} parent=1 // pred_region
      _
    $region13: #{tpu_custom_call.1} parent=1 // pred_fallthru
      _
    %v15 = vld [vmem:[%s0] sm:$0xff]
    %v16 = vld [vmem:[%s1] sm:$0xff]
    %v17 = vld [vmem:[%s1 + $0x8] sm:$0xff]
    %v18 = vld [vmem:[%s1 + $0x10] sm:$0xff]
    %v19 = vld [vmem:[%s1 + $0x18] sm:$0xff]
    %v20 = vld [vmem:[%s1 + $0x20] sm:$0xff]
    %v21 = vld [vmem:[%s1 + $0x28] sm:$0xff]
    %v22 = vld [vmem:[%s1 + $0x30] sm:$0xff]
    %v23 = vld [vmem:[%s1 + $0x38] sm:$0xff]
    %v24 = vld [vmem:[%s1 + $0x40] sm:$0xff]
    %v25 = vld [vmem:[%s1 + $0x48] sm:$0xff]
    %v26 = vld [vmem:[%s1 + $0x50] sm:$0xff]
    %v27 = vld [vmem:[%s1 + $0x58] sm:$0xff]
    %v28 = vld [vmem:[%s1 + $0x60] sm:$0xff]
    %v29 = vld [vmem:[%s1 + $0x68] sm:$0xff]
    %v30 = vld [vmem:[%s1 + $0x70] sm:$0xff]
    %v31 = vld [vmem:[%s1 + $0x78] sm:$0xff]
    %v32 = vld [vmem:[%s2] sm:$0x1]
    %v34 = vlaneseq
    %v35 = vshrl.u32 %v34, 7
    %v36 = vsub.s32 0, %v35
    %v37 = vrot.slane %v32, %v36
    %39 = vmatprep.subr.mxu0 0.0
    %40 = vmatpush1.msra.mxu0 %v31
    %41 = vmatprep.subr.mxu0 0.0
    %42 = vmatpush1.msra.mxu0 %v30
    %43 = vmatprep.subr.mxu0 0.0
    %44 = vmatpush1.msra.mxu0 %v29
    %45 = vmatprep.subr.mxu0 0.0
    %46 = vmatpush1.msra.mxu0 %v28
    %47 = vmatprep.subr.mxu0 0.0
    %48 = vmatpush1.msra.mxu0 %v27
    %49 = vmatprep.subr.mxu0 0.0
    %50 = vmatpush1.msra.mxu0 %v26
    %51 = vmatprep.subr.mxu0 0.0
    %52 = vmatpush1.msra.mxu0 %v25
    %53 = vmatprep.subr.mxu0 0.0
    %54 = vmatpush1.msra.mxu0 %v24
    %55 = vmatprep.subr.mxu0 0.0
    %56 = vmatpush1.msra.mxu0 %v23
    %57 = vmatprep.subr.mxu0 0.0
    %58 = vmatpush1.msra.mxu0 %v22
    %59 = vmatprep.subr.mxu0 0.0
    %60 = vmatpush1.msra.mxu0 %v21
    %61 = vmatprep.subr.mxu0 0.0
    %62 = vmatpush1.msra.mxu0 %v20
    %63 = vmatprep.subr.mxu0 0.0
    %64 = vmatpush1.msra.mxu0 %v19
    %65 = vmatprep.subr.mxu0 0.0
    %66 = vmatpush1.msra.mxu0 %v18
    %67 = vmatprep.subr.mxu0 0.0
    %68 = vmatpush1.msra.mxu0 %v17
    %69 = vmatprep.subr.mxu0 0.0
    %70 = vmatpush1.msra.mxu0 %v16
    %71 = vmatprep.subr.mxu0 0.0
    %72 = vmatpush2.msra.mxu0 0.0
    %73 = vmatprep.subr.mxu0 0.0
    %74 = vmatpush2.msra.mxu0 0.0
    %75 = vmatprep.subr.mxu0 0.0
    %76 = vmatpush2.msra.mxu0 0.0
    %77 = vmatprep.subr.mxu0 0.0
    %78 = vmatpush2.msra.mxu0 0.0
    %79 = vmatprep.subr.mxu0 0.0
    %80 = vmatpush2.msra.mxu0 0.0
    %81 = vmatprep.subr.mxu0 0.0
    %82 = vmatpush2.msra.mxu0 0.0
    %83 = vmatprep.subr.mxu0 0.0
    %84 = vmatpush2.msra.mxu0 0.0
    %85 = vmatprep.subr.mxu0 0.0
    %86 = vmatpush2.msra.mxu0 0.0
    %87 = vmatprep.subr.mxu0 0.0
    %88 = vmatpush2.msra.mxu0 0.0
    %89 = vmatprep.subr.mxu0 0.0
    %90 = vmatpush2.msra.mxu0 0.0
    %91 = vmatprep.subr.mxu0 0.0
    %92 = vmatpush2.msra.mxu0 0.0
    %93 = vmatprep.subr.mxu0 0.0
    %94 = vmatpush2.msra.mxu0 0.0
    %95 = vmatprep.subr.mxu0 0.0
    %96 = vmatpush2.msra.mxu0 0.0
    %97 = vmatprep.subr.mxu0 0.0
    %98 = vmatpush2.msra.mxu0 0.0
    %99 = vmatprep.subr.mxu0 0.0
    %100 = vmatpush2.msra.mxu0 0.0
    %101 = vmatprep.subr.mxu0 0.0
    %102 = vmatpush2.msra.mxu0 0.0
    %103 = vmatprep.mubr.f32.mxu0 0.0
    %104 = vmatmul.mubr.f32.gmra.mxu0 %v15
    %v105 = vpop.f32.mrf.mxu0
    %v106 = vadd.f32 %v37, %v105
    %v107 = vpop.f32.mrf.mxu0
    %108 = vdwg.mxu0
    %vm109 = vcmask 523264
    %110 = vst.msk [vmem:[#allocation2] sm:$0xff] %vm109, %v106
    // Predicated region
    $region14: #{tpu_custom_call.1} parent=1 // pred_check
      _
    $region15: #{tpu_custom_call.1} parent=1 // pred_check_branch
      %112 = sbr.rel (0) target = $region17
    $region16: #{tpu_custom_call.1} parent=1 // pred_region
      %s114 = ssub.s32 128, 32
      %115 = vsyncadd [#allocation3], %s114
      %s116 = sshll.u32 [#allocation2], 4
      %s117 = int_to_ptr.vmem [resolvable:$true] %s116
      %122 = dma.vmem_to_hbm [thread:$0]  %s117, 32, %s3, [#allocation3], 32, 32, 2
    $region17: #{tpu_custom_call.1} parent=1 // pred_fallthru
      _
    // Predicated region
    $region18: #{tpu_custom_call.1} parent=1 // pred_check
      _
    $region19: #{tpu_custom_call.1} parent=1 // pred_check_branch
      %124 = sbr.rel (0) target = $region21
    $region20: #{tpu_custom_call.1} parent=1 // pred_region
      %125 = dma.done [#allocation3], 128
    $region21: #{tpu_custom_call.1} parent=1 // pred_fallthru
      _
    %126 = vsyncpa [#allocation3], 1

</llo_original>
